<compile_context>
chip_gen: v6e
topology: v6e:2x2x1
jax: 0.10.0
libtpu: 0.0.40
codegen_flags: <defaults>
</compile_context>

<pallas_src>
import math
import functools

import jax
import jax.numpy as jnp
from jax.experimental import pallas as pl
from jax.experimental.pallas import tpu as pltpu

LN_EPS = 1e-12   # BertLayerNorm default eps
_LANE = 128      # TPU lane width (last-dim tiling unit)


def _round_up(n, mult):
    return ((n + mult - 1) // mult) * mult


def _gelu_exact(h):
    # exact erf GELU (matches PyTorch / BERT gelu)
    return 0.5 * h * (1.0 + jax.lax.erf(h * jnp.float32(1.0 / math.sqrt(2.0))))


def _gelu_tanh(h):
    # tanh approximation: transcendental goes to the EUP slot instead of a
    # long VALU erf polynomial.  Slightly different numerics; opt-in.
    c = jnp.float32(math.sqrt(2.0 / math.pi))
    return 0.5 * h * (1.0 + jnp.tanh(c * (h + jnp.float32(0.044715) * h * h * h)))


def _cls_head_kernel(x_ref, w1_ref, b1_ref, gamma_ref, beta_ref,
                     wdec_ref, bias_ref, o_ref, ln_ref, *, approx_gelu):
    """grid = (row tiles, decoder-column tiles).

    j == 0 : dense -> gelu -> dropout(eval) -> LayerNorm for this row tile,
             stored once into `ln_ref` (VMEM scratch, decoder-weight dtype).
    every j: one (hidden, tn) column tile of Wdec -> one (tm, tn) output tile.
    """
    j = pl.program_id(1)

    @pl.when(j == 0)
    def _():
        w1 = w1_ref[...]
        # Cast x to the weight dtype so both MXU operands share one dtype
        # (bf16 weights -> native bf16 MXU path); accumulate in f32.
        h = jnp.dot(x_ref[...].astype(w1.dtype), w1,
                    preferred_element_type=jnp.float32)
        h = h + b1_ref[...].astype(jnp.float32)                  # (1, H) bcast

        g = _gelu_tanh(h) if approx_gelu else _gelu_exact(h)

        # dropout: eval-mode identity (deterministic forward).
        # TODO(synk): training-mode dropout (stateful PRNG mask) not implemented.

        # BertLayerNorm over hidden dim -- single-pass stats, variance clamped
        # at 0 so f32 cancellation can never feed a negative value to rsqrt.
        mean = jnp.mean(g, axis=-1, keepdims=True)
        mean_sq = jnp.mean(g * g, axis=-1, keepdims=True)
        var = jnp.maximum(mean_sq - mean * mean, 0.0)
        ln = (g - mean) * jax.lax.rsqrt(var + jnp.float32(LN_EPS))
        ln = (ln * gamma_ref[...].astype(jnp.float32)
              + beta_ref[...].astype(jnp.float32))
        ln_ref[...] = ln.astype(ln_ref.dtype)                    # decoder dtype

    # decoder: ln (already in Wdec's dtype) @ Wdec column tile, f32 accumulate.
    # The module sets decoder.bias = self.bias, so the bias IS applied.
    out = jnp.dot(ln_ref[...], wdec_ref[...], preferred_element_type=jnp.float32)
    out = out + bias_ref[...].astype(jnp.float32)
    o_ref[...] = out.astype(o_ref.dtype)


@functools.partial(jax.jit,
                   static_argnames=("tm", "tn", "vmem_limit_bytes", "approx_gelu"))
def _cls_head_call(x2d, w1, b1_2d, gamma_2d, beta_2d, wdec, bias_2d, *,
                   tm, tn, vmem_limit_bytes, approx_gelu):
    m, in_pad = x2d.shape
    hidden = w1.shape[1]
    grid = (m // tm, in_pad // tn)
    kernel = functools.partial(_cls_head_kernel, approx_gelu=approx_gelu)

    return pl.pallas_call(
        kernel,
        out_shape=jax.ShapeDtypeStruct((m, in_pad), x2d.dtype),
        grid_spec=pltpu.PrefetchScalarGridSpec(
            num_scalar_prefetch=0,
            grid=grid,
            in_specs=[
                pl.BlockSpec((tm, in_pad), lambda i, j: (i, 0)),      # x rows (resident across j)
                pl.BlockSpec((in_pad, hidden), lambda i, j: (0, 0)),  # W1 (grid-invariant)
                pl.BlockSpec((1, hidden), lambda i, j: (0, 0)),       # b1
                pl.BlockSpec((1, hidden), lambda i, j: (0, 0)),       # gamma
                pl.BlockSpec((1, hidden), lambda i, j: (0, 0)),       # beta
                pl.BlockSpec((hidden, tn), lambda i, j: (0, j)),      # Wdec column tile (streamed)
                pl.BlockSpec((1, tn), lambda i, j: (0, j)),           # bias column tile
            ],
            out_specs=pl.BlockSpec((tm, tn), lambda i, j: (i, j)),
            # LN(dense(x)) for the current row tile, kept in the decoder
            # weight's dtype so the second matmul is bf16xbf16 when Wdec is
            # bf16.  Persists across the j (decoder column) loop.
            scratch_shapes=[pltpu.VMEM((tm, hidden), wdec.dtype)],
        ),
        compiler_params=pltpu.CompilerParams(
            dimension_semantics=("parallel", "arbitrary"),
            vmem_limit_bytes=vmem_limit_bytes),
    )(x2d, w1, b1_2d, gamma_2d, beta_2d, wdec, bias_2d)


@functools.lru_cache(maxsize=1)
def _vmem_budget_bytes():
    """Generation-aware VMEM request: ~80% of physical per-core VMEM
    (v5e/v6e: 128 MiB -> ~102 MiB, v7x: 64 MiB -> ~51 MiB), leaving headroom
    for Mosaic internal scratch holding the (tm, hidden) f32 intermediates."""
    cap = 64 * 1024 * 1024            # conservative (v7x-sized) fallback
    try:
        cap = int(getattr(pltpu.get_tpu_info(), "vmem_capacity_bytes", cap))
    except Exception:
        pass
    return int(cap * 0.80)


def _choose_tiles(m, in_pad, hidden, x_itemsize, w_itemsize, out_itemsize,
                  tm_req, vmem_budget):
    # Row tile: floor at 128 so small M never collapses to an 8-row MXU tile;
    # cap at the request.  No forced grid split: v5e/v6e have one TensorCore,
    # and on v7x splitting tiny M only re-DMAs the invariant weights.
    tm = max(_LANE, min(int(tm_req), _round_up(m, _LANE)))
    # Large hidden under a small (v7x-sized) budget: shrink the row tile so
    # the (tm, hidden) f32 intermediates + LN scratch stay modest.
    if hidden >= 4096 and vmem_budget <= 56 * 1024 * 1024:
        tm = min(tm, _LANE)

    def footprint(tn):
        w1_b = 2 * in_pad * hidden * w_itemsize        # double-buffered (DMA'd once)
        wdec_b = 2 * hidden * tn * w_itemsize          # double-buffered tiles
        x_b = 2 * tm * in_pad * x_itemsize
        out_b = 2 * tm * tn * out_itemsize
        ln_b = tm * hidden * w_itemsize                # scratch
        tmp_b = 4 * tm * hidden * 4                    # h/g/ln f32 temporaries
        small = 16 * (hidden + in_pad) * 4
        return w1_b + wdec_b + x_b + out_b + ln_b + tmp_b + small

    # Decoder-column tile: full-resident Wdec when it fits, otherwise stream
    # it in the largest lane-multiple column tile that fits the budget.
    tn = in_pad
    if footprint(in_pad) > vmem_budget:
        for cand in (1024, 512, 384, 256, 128):
            if cand < in_pad and in_pad % cand == 0 and footprint(cand) <= vmem_budget:
                tn = cand
                break
        else:
            tn = _LANE  # in_pad is always a multiple of 128
    # TODO(synk): K-tile W1 as well for in_size large enough that even a
    # single resident W1 exceeds the VMEM budget.
    return tm, tn


def prepare_params(params, param_dtype=None):
    """Pad the feature dim to a multiple of 128 lanes and optionally cast the
    weight matrices (e.g. to bf16) ONCE, outside the per-call path."""
    w1, b1, gamma, beta, wdec, bias = (
        params["w1"], params["b1"], params["gamma"], params["beta"],
        params["wdec"], params["bias"])
    in_size, hidden = w1.shape
    in_pad = _round_up(in_size, _LANE)

    if param_dtype is not None:
        w1 = w1.astype(param_dtype)
        wdec = wdec.astype(param_dtype)
    if in_pad != in_size:
        # Zero padding is mathematically inert (padded W1 rows / Wdec cols /
        # bias entries are zero) and makes output stores full-width vst.
        w1 = jnp.pad(w1, ((0, in_pad - in_size), (0, 0)))
        wdec = jnp.pad(wdec, ((0, 0), (0, in_pad - in_size)))
        bias = jnp.pad(bias, ((0, in_pad - in_size),))

    return {
        "in_size": in_size, "in_pad": in_pad, "hidden": hidden,
        "w1": w1,
        "b1": b1.reshape(1, hidden),
        "gamma": gamma.reshape(1, hidden),
        "beta": beta.reshape(1, hidden),
        "wdec": wdec,
        "bias": bias.reshape(1, in_pad),
    }


def cls_head_forward(features, params, *, tm=256, approx_gelu=False):
    """features: (..., input_size) -> (..., input_size).  Eval-mode forward.

    `params` may be raw (from init_params) or the result of prepare_params();
    pass prepared params to keep weight padding/casting out of the hot path.
    `tm` is the requested row tile (sweep 128/256/512 for large workloads).
    """
    if "in_pad" not in params:
        params = prepare_params(params)

    in_size = params["in_size"]
    in_pad = params["in_pad"]
    hidden = params["hidden"]
    assert features.shape[-1] == in_size

    lead = features.shape[:-1]
    x2d = features.reshape(-1, in_size)
    m = x2d.shape[0]

    vmem_budget = _vmem_budget_bytes()
    w_itemsize = jnp.dtype(params["wdec"].dtype).itemsize
    x_itemsize = jnp.dtype(features.dtype).itemsize
    tm_eff, tn_eff = _choose_tiles(m, in_pad, hidden, x_itemsize, w_itemsize,
                                   x_itemsize, tm, vmem_budget)

    m_pad = _round_up(m, tm_eff)
    pad_rows = m_pad - m
    pad_cols = in_pad - in_size
    if pad_rows or pad_cols:
        x2d = jnp.pad(x2d, ((0, pad_rows), (0, pad_cols)))

    out = _cls_head_call(x2d, params["w1"], params["b1"], params["gamma"],
                         params["beta"], params["wdec"], params["bias"],
                         tm=tm_eff, tn=tn_eff, vmem_limit_bytes=vmem_budget,
                         approx_gelu=approx_gelu)
    out = out[:m, :in_size]
    return out.reshape(*lead, in_size)


def _reference(features, params, matmul_dtype=None):
    """Pure-JAX reference (eval-mode forward).  `matmul_dtype` emulates the
    kernel's operand casts (e.g. bf16 weights path) for apples-to-apples."""
    def cast(a):
        a = jnp.asarray(a)
        if matmul_dtype is not None:
            a = a.astype(matmul_dtype)
        return a.astype(jnp.float32)

    x = cast(features)
    w1 = cast(params["w1"])
    wdec = cast(params["wdec"])
    h = x @ w1 + params["b1"].astype(jnp.float32)
    g = 0.5 * h * (1.0 + jax.lax.erf(h / jnp.float32(math.sqrt(2.0))))
    mean = jnp.mean(g, axis=-1, keepdims=True)
    var = jnp.mean((g - mean) ** 2, axis=-1, keepdims=True)
    ln = (g - mean) / jnp.sqrt(var + LN_EPS)
    ln = ln * params["gamma"].astype(jnp.float32) + params["beta"].astype(jnp.float32)
    out = cast(ln) @ wdec + params["bias"].astype(jnp.float32)
    return out.astype(features.dtype)


def init_params(key, input_size, hidden_size, dtype=jnp.float32):
    k1, k2, k3 = jax.random.split(key, 3)
    # Deterministic synthetic init (shapes follow the module's __init__,
    # linear weights stored transposed as (in, out)).
    w1 = jax.random.normal(k1, (input_size, hidden_size), dtype) * 0.02
    b1 = jnp.zeros((hidden_size,), dtype)
    gamma = jnp.ones((hidden_size,), dtype)          # BertLayerNorm weight
    beta = jnp.zeros((hidden_size,), dtype)          # BertLayerNorm bias
    wdec = jax.random.normal(k2, (hidden_size, input_size), dtype) * 0.02
    bias = jax.random.normal(k3, (input_size,), dtype) * 0.01
    return {"w1": w1, "b1": b1, "gamma": gamma, "beta": beta,
            "wdec": wdec, "bias": bias}


if __name__ == "__main__":
    input_size, hidden_size = 32, 32
    batch, seq = 2, 8

    key = jax.random.PRNGKey(0)
    kx, kp = jax.random.split(key)
    features = jax.random.normal(kx, (batch, seq, input_size), jnp.float32)
    params = init_params(kp, input_size, hidden_size)

    # f32 weights: exact parity with the pure-JAX reference.
    prepared = prepare_params(params)                       # pad/prep once
    out = jax.block_until_ready(cls_head_forward(features, prepared))
    ref = _reference(features, params)
    assert out.shape == (batch, seq, input_size)
    assert jnp.allclose(out, ref, atol=1e-4, rtol=1e-4), "f32 mismatch vs reference"

    # bf16 weights: production fast path (pure bf16 x bf16 MXU matmuls),
    # compared against a reference that applies the same operand casts.
    prepared_bf16 = prepare_params(params, param_dtype=jnp.bfloat16)
    out_bf16 = jax.block_until_ready(cls_head_forward(features, prepared_bf16))
    ref_bf16 = _reference(features, params, matmul_dtype=jnp.bfloat16)
    assert jnp.allclose(out_bf16, ref_bf16, atol=2e-2, rtol=2e-2), \
        "bf16 mismatch vs reference"

    print("KERNEL_OK")
</pallas_src>

<mosaic_0001>
module attributes {stable_mosaic.version = 11 : i64} {
  func.func @_cls_head_kernel(%arg0: i32, %arg1: i32, %arg2: memref<128x128xf32, #tpu.memory_space<vmem>>, %arg3: memref<128x32xf32, #tpu.memory_space<vmem>>, %arg4: memref<1x32xf32, #tpu.memory_space<vmem>>, %arg5: memref<1x32xf32, #tpu.memory_space<vmem>>, %arg6: memref<1x32xf32, #tpu.memory_space<vmem>>, %arg7: memref<32x128xf32, #tpu.memory_space<vmem>>, %arg8: memref<1x128xf32, #tpu.memory_space<vmem>>, %arg9: memref<128x128xf32, #tpu.memory_space<vmem>>, %arg10: memref<128x32xf32, #tpu.memory_space<vmem>>) attributes {dimension_semantics = [#tpu.dimension_semantics<parallel>, #tpu.dimension_semantics<arbitrary>], iteration_bounds = array<i64: 1, 1>, scalar_prefetch = 0 : i64, scratch_operands = 1 : i64, tpu.core_type = #tpu.core_type<tc>, window_params = [{transform_indices = @transform_0, window_bounds = array<i64: 128, 128>}, {pipeline_mode = #tpu.pipeline_mode<synchronous>, transform_indices = @transform_1, window_bounds = array<i64: 128, 32>}, {pipeline_mode = #tpu.pipeline_mode<synchronous>, transform_indices = @transform_2, window_bounds = array<i64: 1, 32>}, {pipeline_mode = #tpu.pipeline_mode<synchronous>, transform_indices = @transform_3, window_bounds = array<i64: 1, 32>}, {pipeline_mode = #tpu.pipeline_mode<synchronous>, transform_indices = @transform_4, window_bounds = array<i64: 1, 32>}, {transform_indices = @transform_5, window_bounds = array<i64: 32, 128>}, {transform_indices = @transform_6, window_bounds = array<i64: 1, 128>}, {transform_indices = @transform_7, window_bounds = array<i64: 128, 128>}]} {
    %c0_i32 = arith.constant 0 : i32
    %0 = arith.cmpi eq, %arg1, %c0_i32 : i32
    %1 = arith.extui %0 : i1 to i32
    %c0_i32_0 = arith.constant 0 : i32
    %2 = arith.cmpi ne, %1, %c0_i32_0 : i32
    scf.if %2 {
      %c0_8 = arith.constant 0 : index
      %c0_9 = arith.constant 0 : index
      %10 = vector.load %arg3[%c0_8, %c0_9] : memref<128x32xf32, #tpu.memory_space<vmem>>, vector<128x32xf32>
      %c0_10 = arith.constant 0 : index
      %c0_11 = arith.constant 0 : index
      %11 = vector.load %arg2[%c0_10, %c0_11] : memref<128x128xf32, #tpu.memory_space<vmem>>, vector<128x128xf32>
      %cst_12 = arith.constant dense<0.000000e+00> : vector<128x32xf32>
      %12 = tpu.matmul %11, %10, %cst_12 {dimension_numbers = #tpu.dot_dimension_numbers<[1], [0], [0], [1], [0, 0, 1, 1], [], []>} : vector<128x128xf32>, vector<128x32xf32>, vector<128x32xf32> -> vector<128x32xf32>
      %c0_13 = arith.constant 0 : index
      %c0_14 = arith.constant 0 : index
      %13 = vector.load %arg4[%c0_13, %c0_14] : memref<1x32xf32, #tpu.memory_space<vmem>>, vector<1x32xf32>
      %14 = vector.broadcast %13 : vector<1x32xf32> to vector<128x32xf32>
      %15 = arith.addf %12, %14 : vector<128x32xf32>
      %cst_15 = arith.constant 5.000000e-01 : f32
      %16 = vector.broadcast %cst_15 : f32 to vector<128x32xf32>
      %17 = arith.mulf %16, %15 : vector<128x32xf32>
      %cst_16 = arith.constant 0.707106769 : f32
      %18 = vector.broadcast %cst_16 : f32 to vector<128x32xf32>
      %19 = arith.mulf %15, %18 : vector<128x32xf32>
      %20 = math.erf %19 : vector<128x32xf32>
      %cst_17 = arith.constant 1.000000e+00 : f32
      %21 = vector.broadcast %cst_17 : f32 to vector<128x32xf32>
      %22 = arith.addf %21, %20 : vector<128x32xf32>
      %23 = arith.mulf %17, %22 : vector<128x32xf32>
      %cst_18 = arith.constant dense<0.000000e+00> : vector<128xf32>
      %24 = vector.multi_reduction <add>, %23, %cst_18 [1] : vector<128x32xf32> to vector<128xf32>
      %25 = vector.shape_cast %24 : vector<128xf32> to vector<128x1xf32>
      %cst_19 = arith.constant 3.200000e+01 : f32
      %26 = vector.broadcast %cst_19 : f32 to vector<128x1xf32>
      %27 = arith.divf %25, %26 : vector<128x1xf32>
      %28 = arith.mulf %23, %23 : vector<128x32xf32>
      %cst_20 = arith.constant dense<0.000000e+00> : vector<128xf32>
      %29 = vector.multi_reduction <add>, %28, %cst_20 [1] : vector<128x32xf32> to vector<128xf32>
      %30 = vector.shape_cast %29 : vector<128xf32> to vector<128x1xf32>
      %cst_21 = arith.constant 3.200000e+01 : f32
      %31 = vector.broadcast %cst_21 : f32 to vector<128x1xf32>
      %32 = arith.divf %30, %31 : vector<128x1xf32>
      %33 = arith.mulf %27, %27 : vector<128x1xf32>
      %34 = arith.subf %32, %33 : vector<128x1xf32>
      %cst_22 = arith.constant 0.000000e+00 : f32
      %35 = vector.broadcast %cst_22 : f32 to vector<128x1xf32>
      %36 = arith.maximumf %34, %35 : vector<128x1xf32>
      %37 = vector.broadcast %27 : vector<128x1xf32> to vector<128x32xf32>
      %38 = arith.subf %23, %37 : vector<128x32xf32>
      %cst_23 = arith.constant 9.99999996E-13 : f32
      %39 = vector.broadcast %cst_23 : f32 to vector<128x1xf32>
      %40 = arith.addf %36, %39 : vector<128x1xf32>
      %41 = math.rsqrt %40 : vector<128x1xf32>
      %42 = vector.broadcast %41 : vector<128x1xf32> to vector<128x32xf32>
      %43 = arith.mulf %38, %42 : vector<128x32xf32>
      %c0_24 = arith.constant 0 : index
      %c0_25 = arith.constant 0 : index
      %44 = vector.load %arg5[%c0_24, %c0_25] : memref<1x32xf32, #tpu.memory_space<vmem>>, vector<1x32xf32>
      %45 = vector.broadcast %44 : vector<1x32xf32> to vector<128x32xf32>
      %46 = arith.mulf %43, %45 : vector<128x32xf32>
      %c0_26 = arith.constant 0 : index
      %c0_27 = arith.constant 0 : index
      %47 = vector.load %arg6[%c0_26, %c0_27] : memref<1x32xf32, #tpu.memory_space<vmem>>, vector<1x32xf32>
      %48 = vector.broadcast %47 : vector<1x32xf32> to vector<128x32xf32>
      %49 = arith.addf %46, %48 : vector<128x32xf32>
      %c0_28 = arith.constant 0 : index
      %c0_29 = arith.constant 0 : index
      %50 = vector.load %arg10[%c0_28, %c0_29] : memref<128x32xf32, #tpu.memory_space<vmem>>, vector<128x32xf32>
      tpu.vector_store %arg10[%c0_28, %c0_29], %49 {strides = array<i32>} : memref<128x32xf32, #tpu.memory_space<vmem>>, vector<128x32xf32>,
    } else {
    }
    %c0 = arith.constant 0 : index
    %c0_1 = arith.constant 0 : index
    %3 = vector.load %arg10[%c0, %c0_1] : memref<128x32xf32, #tpu.memory_space<vmem>>, vector<128x32xf32>
    %c0_2 = arith.constant 0 : index
    %c0_3 = arith.constant 0 : index
    %4 = vector.load %arg7[%c0_2, %c0_3] : memref<32x128xf32, #tpu.memory_space<vmem>>, vector<32x128xf32>
    %cst = arith.constant dense<0.000000e+00> : vector<128x128xf32>
    %5 = tpu.matmul %3, %4, %cst {dimension_numbers = #tpu.dot_dimension_numbers<[1], [0], [0], [1], [0, 0, 1, 1], [], []>} : vector<128x32xf32>, vector<32x128xf32>, vector<128x128xf32> -> vector<128x128xf32>
    %c0_4 = arith.constant 0 : index
    %c0_5 = arith.constant 0 : index
    %6 = vector.load %arg8[%c0_4, %c0_5] : memref<1x128xf32, #tpu.memory_space<vmem>>, vector<1x128xf32>
    %7 = vector.broadcast %6 : vector<1x128xf32> to vector<128x128xf32>
    %8 = arith.addf %5, %7 : vector<128x128xf32>
    %c0_6 = arith.constant 0 : index
    %c0_7 = arith.constant 0 : index
    %9 = vector.load %arg9[%c0_6, %c0_7] : memref<128x128xf32, #tpu.memory_space<vmem>>, vector<128x128xf32>
    tpu.vector_store %arg9[%c0_6, %c0_7], %8 {strides = array<i32>} : memref<128x128xf32, #tpu.memory_space<vmem>>, vector<128x128xf32>,
    return
  }
  func.func @transform_0(%arg0: i32, %arg1: i32) -> (i32, i32) {
    %c0_i32 = arith.constant 0 : i32
    %c0_i32_0 = arith.constant 0 : i32
    return %arg0, %c0_i32 : i32, i32
  }
  func.func @transform_1(%arg0: i32, %arg1: i32) -> (i32, i32) {
    %c0_i32 = arith.constant 0 : i32
    %c0_i32_0 = arith.constant 0 : i32
    %c0_i32_1 = arith.constant 0 : i32
    return %c0_i32, %c0_i32_0 : i32, i32
  }
  func.func @transform_2(%arg0: i32, %arg1: i32) -> (i32, i32) {
    %c0_i32 = arith.constant 0 : i32
    %c0_i32_0 = arith.constant 0 : i32
    %c0_i32_1 = arith.constant 0 : i32
    return %c0_i32, %c0_i32_0 : i32, i32
  }
  func.func @transform_3(%arg0: i32, %arg1: i32) -> (i32, i32) {
    %c0_i32 = arith.constant 0 : i32
    %c0_i32_0 = arith.constant 0 : i32
    %c0_i32_1 = arith.constant 0 : i32
    return %c0_i32, %c0_i32_0 : i32, i32
  }
  func.func @transform_4(%arg0: i32, %arg1: i32) -> (i32, i32) {
    %c0_i32 = arith.constant 0 : i32
    %c0_i32_0 = arith.constant 0 : i32
    %c0_i32_1 = arith.constant 0 : i32
    return %c0_i32, %c0_i32_0 : i32, i32
  }
  func.func @transform_5(%arg0: i32, %arg1: i32) -> (i32, i32) {
    %c0_i32 = arith.constant 0 : i32
    %c0_i32_0 = arith.constant 0 : i32
    return %c0_i32, %arg1 : i32, i32
  }
  func.func @transform_6(%arg0: i32, %arg1: i32) -> (i32, i32) {
    %c0_i32 = arith.constant 0 : i32
    %c0_i32_0 = arith.constant 0 : i32
    return %c0_i32, %arg1 : i32, i32
  }
  func.func @transform_7(%arg0: i32, %arg1: i32) -> (i32, i32) {
    %c0_i32 = arith.constant 0 : i32
    return %arg0, %arg1 : i32, i32
  }
}

</mosaic_0001>

<llo_original>
// kernel: _cls_head_call.1
$region0: #{_cls_head_call.1}
  #allocation0 [shape = 'u32[]', space=smem, size = 0x4, offset = 0x4, fixed_abs, tag = 'smem constant byte address 0x4 - core index']
  #allocation1 [shape = 'u32[144,128]{1,0:T(1,128)}', space=vmem, size = 0x12000, scoped, tag = 'internal scratch']
  #allocation2 [shape = 'f32[128,32]{1,0:T(8,128)}', space=vmem, size = 0x10000, scoped, tag = 'scratch operand']
  %s0 = inlined_call_operand.vmem [shape: f32[128,128], index: 0, kind: input, shape index: {}]
  %s1 = inlined_call_operand.vmem [shape: f32[128,32], index: 1, kind: input, shape index: {}]
  %s2 = inlined_call_operand.vmem [shape: f32[1,32], index: 2, kind: input, shape index: {}]
  %s3 = inlined_call_operand.vmem [shape: f32[1,32], index: 3, kind: input, shape index: {}]
  %s4 = inlined_call_operand.vmem [shape: f32[1,32], index: 4, kind: input, shape index: {}]
  %s5 = inlined_call_operand.vmem [shape: f32[32,128], index: 5, kind: input, shape index: {}]
  %s6 = inlined_call_operand.vmem [shape: f32[1,128], index: 6, kind: input, shape index: {}]
  %s7 = inlined_call_operand.hbm [shape: f32[128,128], index: 7, kind: output, shape index: {}]
  %s8 = sld [smem:[#allocation0]]
  $region42: #{_cls_head_call.1} parent=0
    _
  %s10 = ssub.s32 1, %s8
  %s11 = scalar_select 0, %s10, %s8
  $region1: #{_cls_head_call.1} parent=0
    #allocation3 [shape = 'u8[65536]{0}', space=vmem, size = 0x10000, scoped, tag = 'output window, operand 0, single buffered']
    #allocation4 [shape = 's32[1]{0}', space=sflag, size = 0x4, scoped, tag = 'scoped memory for _cls_head_call.1']
    %12 = vsyncpa [#allocation4], 0
    // Predicated region
    $region2: #{_cls_head_call.1} parent=1 // pred_check
      _
    $region3: #{_cls_head_call.1} parent=1 // pred_check_branch
      %14 = sbr.rel (0) target = $region5
    $region4: #{_cls_head_call.1} parent=1 // pred_region
      _
    $region5: #{_cls_head_call.1} parent=1 // pred_fallthru
      _
    // Predicated region
    $region6: #{_cls_head_call.1} parent=1 // pred_check
      _
    $region7: #{_cls_head_call.1} parent=1 // pred_check_branch
      %16 = sbr.rel (0) target = $region9
    $region8: #{_cls_head_call.1} parent=1 // pred_region
      _
    $region9: #{_cls_head_call.1} parent=1 // pred_fallthru
      _
    // Predicated region
    $region10: #{_cls_head_call.1} parent=1 // pred_check
      _
    $region11: #{_cls_head_call.1} parent=1 // pred_check_branch
      %18 = sbr.rel (0) target = $region13
    $region12: #{_cls_head_call.1} parent=1 // pred_region
      _
    $region13: #{_cls_head_call.1} parent=1 // pred_fallthru
      _
    // Predicated region
    $region14: #{_cls_head_call.1} parent=1 // pred_check
      _
    $region15: #{_cls_head_call.1} parent=1 // pred_check_branch
      %20 = sbr.rel (0) target = $region17
    $region16: #{_cls_head_call.1} parent=1 // pred_region
      _
    $region17: #{_cls_head_call.1} parent=1 // pred_fallthru
      _
    // Predicated region
    $region18: #{_cls_head_call.1} parent=1 // pred_check
      _
    $region19: #{_cls_head_call.1} parent=1 // pred_check_branch
      %22 = sbr.rel (0) target = $region21
    $region20: #{_cls_head_call.1} parent=1 // pred_region
      _
    $region21: #{_cls_head_call.1} parent=1 // pred_fallthru
      _
    // Predicated region
    $region22: #{_cls_head_call.1} parent=1 // pred_check
      _
    $region23: #{_cls_head_call.1} parent=1 // pred_check_branch
      %24 = sbr.rel (0) target = $region25
    $region24: #{_cls_head_call.1} parent=1 // pred_region
      _
    $region25: #{_cls_head_call.1} parent=1 // pred_fallthru
      _
    // Predicated region
    $region26: #{_cls_head_call.1} parent=1 // pred_check
      _
    $region27: #{_cls_head_call.1} parent=1 // pred_check_branch
      %26 = sbr.rel (0) target = $region29
    $region28: #{_cls_head_call.1} parent=1 // pred_region
      _
    $region29: #{_cls_head_call.1} parent=1 // pred_fallthru
      _
    %p27 = scmp.eq.s32.totalorder 0, 0
    // Predicated region
    $region30: #{_cls_head_call.1} parent=1 // pred_check
      %p28 = pneg %p27
    $region31: #{_cls_head_call.1} parent=1 // pred_check_branch
      %30 = sbr.rel (%p28) target = $region33
    $region32: #{_cls_head_call.1} parent=1 // pred_region
      %v31 = vld [vmem:[%s1] sm:$0xff]
      %v32 = vld [vmem:[%s1 + $0x8] sm:$0xff]
      %v33 = vld [vmem:[%s1 + $0x10] sm:$0xff]
      %v34 = vld [vmem:[%s1 + $0x18] sm:$0xff]
      %v35 = vld [vmem:[%s1 + $0x20] sm:$0xff]
      %v36 = vld [vmem:[%s1 + $0x28] sm:$0xff]
      %v37 = vld [vmem:[%s1 + $0x30] sm:$0xff]
      %v38 = vld [vmem:[%s1 + $0x38] sm:$0xff]
      %v39 = vld [vmem:[%s1 + $0x40] sm:$0xff]
      %v40 = vld [vmem:[%s1 + $0x48] sm:$0xff]
      %v41 = vld [vmem:[%s1 + $0x50] sm:$0xff]
      %v42 = vld [vmem:[%s1 + $0x58] sm:$0xff]
      %v43 = vld [vmem:[%s1 + $0x60] sm:$0xff]
      %v44 = vld [vmem:[%s1 + $0x68] sm:$0xff]
      %v45 = vld [vmem:[%s1 + $0x70] sm:$0xff]
      %v46 = vld [vmem:[%s1 + $0x78] sm:$0xff]
      %v47 = vld [vmem:[%s0] sm:$0xff]
      %v48 = vld [vmem:[%s0 + $0x8] sm:$0xff]
      %v49 = vld [vmem:[%s0 + $0x10] sm:$0xff]
      %v50 = vld [vmem:[%s0 + $0x18] sm:$0xff]
      %v51 = vld [vmem:[%s0 + $0x20] sm:$0xff]
      %v52 = vld [vmem:[%s0 + $0x28] sm:$0xff]
      %v53 = vld [vmem:[%s0 + $0x30] sm:$0xff]
      %v54 = vld [vmem:[%s0 + $0x38] sm:$0xff]
      %v55 = vld [vmem:[%s0 + $0x40] sm:$0xff]
      %v56 = vld [vmem:[%s0 + $0x48] sm:$0xff]
      %v57 = vld [vmem:[%s0 + $0x50] sm:$0xff]
      %v58 = vld [vmem:[%s0 + $0x58] sm:$0xff]
      %v59 = vld [vmem:[%s0 + $0x60] sm:$0xff]
      %v60 = vld [vmem:[%s0 + $0x68] sm:$0xff]
      %v61 = vld [vmem:[%s0 + $0x70] sm:$0xff]
      %v62 = vld [vmem:[%s0 + $0x78] sm:$0xff]
      %v63 = vld [vmem:[%s2] sm:$0x1]
      %v65 = vlaneseq
      %v66 = vshrl.u32 %v65, 7
      %v67 = vsub.s32 0, %v66
      %v68 = vrot.slane %v63, %v67
      %70 = vmatprep.subr.mxu0 0.0
      %71 = vmatpush1.msra.mxu0 %v46
      %72 = vmatprep.subr.mxu0 0.0
      %73 = vmatpush1.msra.mxu0 %v45
      %74 = vmatprep.subr.mxu0 0.0
      %75 = vmatpush1.msra.mxu0 %v44
      %76 = vmatprep.subr.mxu0 0.0
      %77 = vmatpush1.msra.mxu0 %v43
      %78 = vmatprep.subr.mxu0 0.0
      %79 = vmatpush1.msra.mxu0 %v42
      %80 = vmatprep.subr.mxu0 0.0
      %81 = vmatpush1.msra.mxu0 %v41
      %82 = vmatprep.subr.mxu0 0.0
      %83 = vmatpush1.msra.mxu0 %v40
      %84 = vmatprep.subr.mxu0 0.0
      %85 = vmatpush1.msra.mxu0 %v39
      %86 = vmatprep.subr.mxu0 0.0
      %87 = vmatpush1.msra.mxu0 %v38
      %88 = vmatprep.subr.mxu0 0.0
      %89 = vmatpush1.msra.mxu0 %v37
      %90 = vmatprep.subr.mxu0 0.0
      %91 = vmatpush1.msra.mxu0 %v36
      %92 = vmatprep.subr.mxu0 0.0
      %93 = vmatpush1.msra.mxu0 %v35
      %94 = vmatprep.subr.mxu0 0.0
      %95 = vmatpush1.msra.mxu0 %v34
      %96 = vmatprep.subr.mxu0 0.0
      %97 = vmatpush1.msra.mxu0 %v33
      %98 = vmatprep.subr.mxu0 0.0
      %99 = vmatpush1.msra.mxu0 %v32
      %100 = vmatprep.subr.mxu0 0.0
      %101 = vmatpush1.msra.mxu0 %v31
      %102 = vmatprep.subr.mxu0 0.0
      %103 = vmatpush2.msra.mxu0 0.0
      %104 = vmatprep.subr.mxu0 0.0
      %105 = vmatpush2.msra.mxu0 0.0
      %106 = vmatprep.subr.mxu0 0.0
      %107 = vmatpush2.msra.mxu0 0.0
      %108 = vmatprep.subr.mxu0 0.0
      %109 = vmatpush2.msra.mxu0 0.0
      %110 = vmatprep.subr.mxu0 0.0
      %111 = vmatpush2.msra.mxu0 0.0
      %112 = vmatprep.subr.mxu0 0.0
      %113 = vmatpush2.msra.mxu0 0.0
      %114 = vmatprep.subr.mxu0 0.0
      %115 = vmatpush2.msra.mxu0 0.0
      %116 = vmatprep.subr.mxu0 0.0
      %117 = vmatpush2.msra.mxu0 0.0
      %118 = vmatprep.subr.mxu0 0.0
      %119 = vmatpush2.msra.mxu0 0.0
      %120 = vmatprep.subr.mxu0 0.0
      %121 = vmatpush2.msra.mxu0 0.0
      %122 = vmatprep.subr.mxu0 0.0
      %123 = vmatpush2.msra.mxu0 0.0
      %124 = vmatprep.subr.mxu0 0.0
      %125 = vmatpush2.msra.mxu0 0.0
      %126 = vmatprep.subr.mxu0 0.0
      %127 = vmatpush2.msra.mxu0 0.0
      %128 = vmatprep.subr.mxu0 0.0
      %129 = vmatpush2.msra.mxu0 0.0
      %130 = vmatprep.subr.mxu0 0.0
      %131 = vmatpush2.msra.mxu0 0.0
      %132 = vmatprep.subr.mxu0 0.0
      %133 = vmatpush2.msra.mxu0 0.0
      %134 = vmatprep.mubr.f32.mxu0 0.0
      %135 = vmatmul.mubr.f32.gmra.mxu0 %v47
      %v136 = vpop.f32.mrf.mxu0
      %v137 = vadd.f32 %v68, %v136
      %v138 = vpop.f32.mrf.mxu0
      %139 = vmatprep.mubr.f32.mxu0 0.0
      %140 = vmatmul.mubr.f32.gmra.mxu0 %v48
      %v141 = vpop.f32.mrf.mxu0
      %v142 = vadd.f32 %v68, %v141
      %v143 = vpop.f32.mrf.mxu0
      %144 = vmatprep.mubr.f32.mxu0 0.0
      %145 = vmatmul.mubr.f32.gmra.mxu0 %v49
      %v146 = vpop.f32.mrf.mxu0
      %v147 = vadd.f32 %v68, %v146
      %v148 = vpop.f32.mrf.mxu0
      %149 = vmatprep.mubr.f32.mxu0 0.0
      %150 = vmatmul.mubr.f32.gmra.mxu0 %v50
      %v151 = vpop.f32.mrf.mxu0
      %v152 = vadd.f32 %v68, %v151
      %v153 = vpop.f32.mrf.mxu0
      %154 = vmatprep.mubr.f32.mxu0 0.0
      %155 = vmatmul.mubr.f32.gmra.mxu0 %v51
      %v156 = vpop.f32.mrf.mxu0
      %v157 = vadd.f32 %v68, %v156
      %v158 = vpop.f32.mrf.mxu0
      %159 = vmatprep.mubr.f32.mxu0 0.0
      %160 = vmatmul.mubr.f32.gmra.mxu0 %v52
      %v161 = vpop.f32.mrf.mxu0
      %v162 = vadd.f32 %v68, %v161
      %v163 = vpop.f32.mrf.mxu0
      %164 = vmatprep.mubr.f32.mxu0 0.0
      %165 = vmatmul.mubr.f32.gmra.mxu0 %v53
      %v166 = vpop.f32.mrf.mxu0
      %v167 = vadd.f32 %v68, %v166
      %v168 = vpop.f32.mrf.mxu0
      %169 = vmatprep.mubr.f32.mxu0 0.0
      %170 = vmatmul.mubr.f32.gmra.mxu0 %v54
      %v171 = vpop.f32.mrf.mxu0
      %v172 = vadd.f32 %v68, %v171
      %v173 = vpop.f32.mrf.mxu0
      %174 = vmatprep.mubr.f32.mxu0 0.0
      %175 = vmatmul.mubr.f32.gmra.mxu0 %v55
      %v176 = vpop.f32.mrf.mxu0
      %v177 = vadd.f32 %v68, %v176
      %v178 = vpop.f32.mrf.mxu0
      %179 = vmatprep.mubr.f32.mxu0 0.0
      %180 = vmatmul.mubr.f32.gmra.mxu0 %v56
      %v181 = vpop.f32.mrf.mxu0
      %v182 = vadd.f32 %v68, %v181
      %v183 = vpop.f32.mrf.mxu0
      %184 = vmatprep.mubr.f32.mxu0 0.0
      %185 = vmatmul.mubr.f32.gmra.mxu0 %v57
      %v186 = vpop.f32.mrf.mxu0
      %v187 = vadd.f32 %v68, %v186
      %v188 = vpop.f32.mrf.mxu0
      %189 = vmatprep.mubr.f32.mxu0 0.0
      %190 = vmatmul.mubr.f32.gmra.mxu0 %v58
      %v191 = vpop.f32.mrf.mxu0
      %v192 = vadd.f32 %v68, %v191
      %v193 = vpop.f32.mrf.mxu0
      %194 = vmatprep.mubr.f32.mxu0 0.0
      %195 = vmatmul.mubr.f32.gmra.mxu0 %v59
      %v196 = vpop.f32.mrf.mxu0
      %v197 = vadd.f32 %v68, %v196
      %v198 = vpop.f32.mrf.mxu0
      %199 = vmatprep.mubr.f32.mxu0 0.0
      %200 = vmatmul.mubr.f32.gmra.mxu0 %v60
      %v201 = vpop.f32.mrf.mxu0
      %v202 = vadd.f32 %v68, %v201
      %v203 = vpop.f32.mrf.mxu0
      %204 = vmatprep.mubr.f32.mxu0 0.0
      %205 = vmatmul.mubr.f32.gmra.mxu0 %v61
      %v206 = vpop.f32.mrf.mxu0
      %v207 = vadd.f32 %v68, %v206
      %v208 = vpop.f32.mrf.mxu0
      %209 = vmatprep.mubr.f32.mxu0 0.0
      %210 = vmatmul.mubr.f32.gmra.mxu0 %v62
      %v211 = vpop.f32.mrf.mxu0
      %v212 = vadd.f32 %v68, %v211
      %v213 = vpop.f32.mrf.mxu0
      %214 = vdwg.mxu0
      %v215 = vmul.f32 %v137, 0.5
      %v216 = vmul.f32 %v142, 0.5
      %v217 = vmul.f32 %v147, 0.5
      %v218 = vmul.f32 %v152, 0.5
      %v219 = vmul.f32 %v157, 0.5
      %v220 = vmul.f32 %v162, 0.5
      %v221 = vmul.f32 %v167, 0.5
      %v222 = vmul.f32 %v172, 0.5
      %v223 = vmul.f32 %v177, 0.5
      %v224 = vmul.f32 %v182, 0.5
      %v225 = vmul.f32 %v187, 0.5
      %v226 = vmul.f32 %v192, 0.5
      %v227 = vmul.f32 %v197, 0.5
      %v228 = vmul.f32 %v202, 0.5
      %v229 = vmul.f32 %v207, 0.5
      %v230 = vmul.f32 %v212, 0.5
      %v231 = vmul.f32 %v137, 0.70710677
      %v232 = vmul.f32 %v142, 0.70710677
      %v233 = vmul.f32 %v147, 0.70710677
      %v234 = vmul.f32 %v152, 0.70710677
      %v235 = vmul.f32 %v157, 0.70710677
      %v236 = vmul.f32 %v162, 0.70710677
      %v237 = vmul.f32 %v167, 0.70710677
      %v238 = vmul.f32 %v172, 0.70710677
      %v239 = vmul.f32 %v177, 0.70710677
      %v240 = vmul.f32 %v182, 0.70710677
      %v241 = vmul.f32 %v187, 0.70710677
      %v242 = vmul.f32 %v192, 0.70710677
      %v243 = vmul.f32 %v197, 0.70710677
      %v244 = vmul.f32 %v202, 0.70710677
      %v245 = vmul.f32 %v207, 0.70710677
      %v246 = vmul.f32 %v212, 0.70710677
      %v247 = verf.f32.pop %v231
      %v248 = verf.f32.pop %v232
      %v249 = verf.f32.pop %v233
      %v250 = verf.f32.pop %v234
      %v251 = verf.f32.pop %v235
      %v252 = verf.f32.pop %v236
      %v253 = verf.f32.pop %v237
      %v254 = verf.f32.pop %v238
      %v255 = verf.f32.pop %v239
      %v256 = verf.f32.pop %v240
      %v257 = verf.f32.pop %v241
      %v258 = verf.f32.pop %v242
      %v259 = verf.f32.pop %v243
      %v260 = verf.f32.pop %v244
      %v261 = verf.f32.pop %v245
      %v262 = verf.f32.pop %v246
      %v263 = vadd.f32 %v247, 1.0
      %v264 = vadd.f32 %v248, 1.0
      %v265 = vadd.f32 %v249, 1.0
      %v266 = vadd.f32 %v250, 1.0
      %v267 = vadd.f32 %v251, 1.0
      %v268 = vadd.f32 %v252, 1.0
      %v269 = vadd.f32 %v253, 1.0
      %v270 = vadd.f32 %v254, 1.0
      %v271 = vadd.f32 %v255, 1.0
      %v272 = vadd.f32 %v256, 1.0
      %v273 = vadd.f32 %v257, 1.0
      %v274 = vadd.f32 %v258, 1.0
      %v275 = vadd.f32 %v259, 1.0
      %v276 = vadd.f32 %v260, 1.0
      %v277 = vadd.f32 %v261, 1.0
      %v278 = vadd.f32 %v262, 1.0
      %v279 = vmul.f32 %v215, %v263
      %v280 = vmul.f32 %v216, %v264
      %v281 = vmul.f32 %v217, %v265
      %v282 = vmul.f32 %v218, %v266
      %v283 = vmul.f32 %v219, %v267
      %v284 = vmul.f32 %v220, %v268
      %v285 = vmul.f32 %v221, %v269
      %v286 = vmul.f32 %v222, %v270
      %v287 = vmul.f32 %v223, %v271
      %v288 = vmul.f32 %v224, %v272
      %v289 = vmul.f32 %v225, %v273
      %v290 = vmul.f32 %v226, %v274
      %v291 = vmul.f32 %v227, %v275
      %v292 = vmul.f32 %v228, %v276
      %v293 = vmul.f32 %v229, %v277
      %v294 = vmul.f32 %v230, %v278
      %vm295 = vcmask 261120
      %v296 = vsel %vm295, %v279, 0.0
      %297 = vadd.xlane.f32.xlu0 %v296
      %v298 = vpop.xlane.xlu0 %297
      %v299 = vsel %vm295, %v280, 0.0
      %300 = vadd.xlane.f32.xlu0 %v299
      %v301 = vpop.xlane.xlu0 %300
      %v302 = vsel %vm295, %v281, 0.0
      %303 = vadd.xlane.f32.xlu0 %v302
      %v304 = vpop.xlane.xlu0 %303
      %v305 = vsel %vm295, %v282, 0.0
      %306 = vadd.xlane.f32.xlu0 %v305
      %v307 = vpop.xlane.xlu0 %306
      %v308 = vsel %vm295, %v283, 0.0
      %309 = vadd.xlane.f32.xlu0 %v308
      %v310 = vpop.xlane.xlu0 %309
      %v311 = vsel %vm295, %v284, 0.0
      %312 = vadd.xlane.f32.xlu0 %v311
      %v313 = vpop.xlane.xlu0 %312
      %v314 = vsel %vm295, %v285, 0.0
      %315 = vadd.xlane.f32.xlu0 %v314
      %v316 = vpop.xlane.xlu0 %315
      %v317 = vsel %vm295, %v286, 0.0
      %318 = vadd.xlane.f32.xlu0 %v317
      %v319 = vpop.xlane.xlu0 %318
      %v320 = vsel %vm295, %v287, 0.0
      %321 = vadd.xlane.f32.xlu0 %v320
      %v322 = vpop.xlane.xlu0 %321
      %v323 = vsel %vm295, %v288, 0.0
      %324 = vadd.xlane.f32.xlu0 %v323
      %v325 = vpop.xlane.xlu0 %324
      %v326 = vsel %vm295, %v289, 0.0
      %327 = vadd.xlane.f32.xlu0 %v326
      %v328 = vpop.xlane.xlu0 %327
      %v329 = vsel %vm295, %v290, 0.0
      %330 = vadd.xlane.f32.xlu0 %v329
      %v331 = vpop.xlane.xlu0 %330
      %v332 = vsel %vm295, %v291, 0.0
      %333 = vadd.xlane.f32.xlu0 %v332
      %v334 = vpop.xlane.xlu0 %333
      %v335 = vsel %vm295, %v292, 0.0
      %336 = vadd.xlane.f32.xlu0 %v335
      %v337 = vpop.xlane.xlu0 %336
      %v338 = vsel %vm295, %v293, 0.0
      %339 = vadd.xlane.f32.xlu0 %v338
      %v340 = vpop.xlane.xlu0 %339
      %v341 = vsel %vm295, %v294, 0.0
      %342 = vadd.xlane.f32.xlu0 %v341
      %v343 = vpop.xlane.xlu0 %342
      %v344 = vrcp.pop 32.0
      %v345 = vmul.f32 %v298, %v344
      %v346 = vmul.f32 %v301, %v344
      %v347 = vmul.f32 %v304, %v344
      %v348 = vmul.f32 %v307, %v344
      %v349 = vmul.f32 %v310, %v344
      %v350 = vmul.f32 %v313, %v344
      %v351 = vmul.f32 %v316, %v344
      %v352 = vmul.f32 %v319, %v344
      %v353 = vmul.f32 %v322, %v344
      %v354 = vmul.f32 %v325, %v344
      %v355 = vmul.f32 %v328, %v344
      %v356 = vmul.f32 %v331, %v344
      %v357 = vmul.f32 %v334, %v344
      %v358 = vmul.f32 %v337, %v344
      %v359 = vmul.f32 %v340, %v344
      %v360 = vmul.f32 %v343, %v344
      %v361 = vmul.f32 %v279, %v279
      %v362 = vmul.f32 %v280, %v280
      %v363 = vmul.f32 %v281, %v281
      %v364 = vmul.f32 %v282, %v282
      %v365 = vmul.f32 %v283, %v283
      %v366 = vmul.f32 %v284, %v284
      %v367 = vmul.f32 %v285, %v285
      %v368 = vmul.f32 %v286, %v286
      %v369 = vmul.f32 %v287, %v287
      %v370 = vmul.f32 %v288, %v288
      %v371 = vmul.f32 %v289, %v289
      %v372 = vmul.f32 %v290, %v290
      %v373 = vmul.f32 %v291, %v291
      %v374 = vmul.f32 %v292, %v292
      %v375 = vmul.f32 %v293, %v293
      %v376 = vmul.f32 %v294, %v294
      %v377 = vsel %vm295, %v361, 0.0
      %378 = vadd.xlane.f32.xlu0 %v377
      %v379 = vpop.xlane.xlu0 %378
      %v380 = vsel %vm295, %v362, 0.0
      %381 = vadd.xlane.f32.xlu0 %v380
      %v382 = vpop.xlane.xlu0 %381
      %v383 = vsel %vm295, %v363, 0.0
      %384 = vadd.xlane.f32.xlu0 %v383
      %v385 = vpop.xlane.xlu0 %384
      %v386 = vsel %vm295, %v364, 0.0
      %387 = vadd.xlane.f32.xlu0 %v386
      %v388 = vpop.xlane.xlu0 %387
      %v389 = vsel %vm295, %v365, 0.0
      %390 = vadd.xlane.f32.xlu0 %v389
      %v391 = vpop.xlane.xlu0 %390
      %v392 = vsel %vm295, %v366, 0.0
      %393 = vadd.xlane.f32.xlu0 %v392
      %v394 = vpop.xlane.xlu0 %393
      %v395 = vsel %vm295, %v367, 0.0
      %396 = vadd.xlane.f32.xlu0 %v395
      %v397 = vpop.xlane.xlu0 %396
      %v398 = vsel %vm295, %v368, 0.0
      %399 = vadd.xlane.f32.xlu0 %v398
      %v400 = vpop.xlane.xlu0 %399
      %v401 = vsel %vm295, %v369, 0.0
      %402 = vadd.xlane.f32.xlu0 %v401
      %v403 = vpop.xlane.xlu0 %402
      %v404 = vsel %vm295, %v370, 0.0
      %405 = vadd.xlane.f32.xlu0 %v404
      %v406 = vpop.xlane.xlu0 %405
      %v407 = vsel %vm295, %v371, 0.0
      %408 = vadd.xlane.f32.xlu0 %v407
      %v409 = vpop.xlane.xlu0 %408
      %v410 = vsel %vm295, %v372, 0.0
      %411 = vadd.xlane.f32.xlu0 %v410
      %v412 = vpop.xlane.xlu0 %411
      %v413 = vsel %vm295, %v373, 0.0
      %414 = vadd.xlane.f32.xlu0 %v413
      %v415 = vpop.xlane.xlu0 %414
      %v416 = vsel %vm295, %v374, 0.0
      %417 = vadd.xlane.f32.xlu0 %v416
      %v418 = vpop.xlane.xlu0 %417
      %v419 = vsel %vm295, %v375, 0.0
      %420 = vadd.xlane.f32.xlu0 %v419
      %v421 = vpop.xlane.xlu0 %420
      %v422 = vsel %vm295, %v376, 0.0
      %423 = vadd.xlane.f32.xlu0 %v422
      %v424 = vpop.xlane.xlu0 %423
      %v425 = vmul.f32 %v379, %v344
      %v426 = vmul.f32 %v382, %v344
      %v427 = vmul.f32 %v385, %v344
      %v428 = vmul.f32 %v388, %v344
      %v429 = vmul.f32 %v391, %v344
      %v430 = vmul.f32 %v394, %v344
      %v431 = vmul.f32 %v397, %v344
      %v432 = vmul.f32 %v400, %v344
      %v433 = vmul.f32 %v403, %v344
      %v434 = vmul.f32 %v406, %v344
      %v435 = vmul.f32 %v409, %v344
      %v436 = vmul.f32 %v412, %v344
      %v437 = vmul.f32 %v415, %v344
      %v438 = vmul.f32 %v418, %v344
      %v439 = vmul.f32 %v421, %v344
      %v440 = vmul.f32 %v424, %v344
      %v441 = vmul.f32 %v345, %v345
      %v442 = vmul.f32 %v346, %v346
      %v443 = vmul.f32 %v347, %v347
      %v444 = vmul.f32 %v348, %v348
      %v445 = vmul.f32 %v349, %v349
      %v446 = vmul.f32 %v350, %v350
      %v447 = vmul.f32 %v351, %v351
      %v448 = vmul.f32 %v352, %v352
      %v449 = vmul.f32 %v353, %v353
      %v450 = vmul.f32 %v354, %v354
      %v451 = vmul.f32 %v355, %v355
      %v452 = vmul.f32 %v356, %v356
      %v453 = vmul.f32 %v357, %v357
      %v454 = vmul.f32 %v358, %v358
      %v455 = vmul.f32 %v359, %v359
      %v456 = vmul.f32 %v360, %v360
      %v457 = vsub.f32 %v425, %v441
      %v458 = vsub.f32 %v426, %v442
      %v459 = vsub.f32 %v427, %v443
      %v460 = vsub.f32 %v428, %v444
      %v461 = vsub.f32 %v429, %v445
      %v462 = vsub.f32 %v430, %v446
      %v463 = vsub.f32 %v431, %v447
      %v464 = vsub.f32 %v432, %v448
      %v465 = vsub.f32 %v433, %v449
      %v466 = vsub.f32 %v434, %v450
      %v467 = vsub.f32 %v435, %v451
      %v468 = vsub.f32 %v436, %v452
      %v469 = vsub.f32 %v437, %v453
      %v470 = vsub.f32 %v438, %v454
      %v471 = vsub.f32 %v439, %v455
      %v472 = vsub.f32 %v440, %v456
      %v473 = vmax.f32 %v457, 0.0
      %v474 = vmax.f32 %v458, 0.0
      %v475 = vmax.f32 %v459, 0.0
      %v476 = vmax.f32 %v460, 0.0
      %v477 = vmax.f32 %v461, 0.0
      %v478 = vmax.f32 %v462, 0.0
      %v479 = vmax.f32 %v463, 0.0
      %v480 = vmax.f32 %v464, 0.0
      %v481 = vmax.f32 %v465, 0.0
      %v482 = vmax.f32 %v466, 0.0
      %v483 = vmax.f32 %v467, 0.0
      %v484 = vmax.f32 %v468, 0.0
      %v485 = vmax.f32 %v469, 0.0
      %v486 = vmax.f32 %v470, 0.0
      %v487 = vmax.f32 %v471, 0.0
      %v488 = vmax.f32 %v472, 0.0
      %v489 = vsub.f32 %v279, %v345
      %v490 = vsub.f32 %v280, %v346
      %v491 = vsub.f32 %v281, %v347
      %v492 = vsub.f32 %v282, %v348
      %v493 = vsub.f32 %v283, %v349
      %v494 = vsub.f32 %v284, %v350
      %v495 = vsub.f32 %v285, %v351
      %v496 = vsub.f32 %v286, %v352
      %v497 = vsub.f32 %v287, %v353
      %v498 = vsub.f32 %v288, %v354
      %v499 = vsub.f32 %v289, %v355
      %v500 = vsub.f32 %v290, %v356
      %v501 = vsub.f32 %v291, %v357
      %v502 = vsub.f32 %v292, %v358
      %v503 = vsub.f32 %v293, %v359
      %v504 = vsub.f32 %v294, %v360
      %v505 = vadd.f32 %v473, 1e-12
      %v506 = vadd.f32 %v474, 1e-12
      %v507 = vadd.f32 %v475, 1e-12
      %v508 = vadd.f32 %v476, 1e-12
      %v509 = vadd.f32 %v477, 1e-12
      %v510 = vadd.f32 %v478, 1e-12
      %v511 = vadd.f32 %v479, 1e-12
      %v512 = vadd.f32 %v480, 1e-12
      %v513 = vadd.f32 %v481, 1e-12
      %v514 = vadd.f32 %v482, 1e-12
      %v515 = vadd.f32 %v483, 1e-12
      %v516 = vadd.f32 %v484, 1e-12
      %v517 = vadd.f32 %v485, 1e-12
      %v518 = vadd.f32 %v486, 1e-12
      %v519 = vadd.f32 %v487, 1e-12
      %v520 = vadd.f32 %v488, 1e-12
      %v521 = vrsqrt.pop %v505
      %v522 = vrsqrt.pop %v506
      %v523 = vrsqrt.pop %v507
      %v524 = vrsqrt.pop %v508
      %v525 = vrsqrt.pop %v509
      %v526 = vrsqrt.pop %v510
      %v527 = vrsqrt.pop %v511
      %v528 = vrsqrt.pop %v512
      %v529 = vrsqrt.pop %v513
      %v530 = vrsqrt.pop %v514
      %v531 = vrsqrt.pop %v515
      %v532 = vrsqrt.pop %v516
      %v533 = vrsqrt.pop %v517
      %v534 = vrsqrt.pop %v518
      %v535 = vrsqrt.pop %v519
      %v536 = vrsqrt.pop %v520
      %v537 = vmul.f32 %v489, %v521
      %v538 = vmul.f32 %v490, %v522
      %v539 = vmul.f32 %v491, %v523
      %v540 = vmul.f32 %v492, %v524
      %v541 = vmul.f32 %v493, %v525
      %v542 = vmul.f32 %v494, %v526
      %v543 = vmul.f32 %v495, %v527
      %v544 = vmul.f32 %v496, %v528
      %v545 = vmul.f32 %v497, %v529
      %v546 = vmul.f32 %v498, %v530
      %v547 = vmul.f32 %v499, %v531
      %v548 = vmul.f32 %v500, %v532
      %v549 = vmul.f32 %v501, %v533
      %v550 = vmul.f32 %v502, %v534
      %v551 = vmul.f32 %v503, %v535
      %v552 = vmul.f32 %v504, %v536
      %v553 = vld [vmem:[%s3] sm:$0x1]
      %v555 = vlaneseq
      %v556 = vshrl.u32 %v555, 7
      %v557 = vsub.s32 0, %v556
      %v558 = vrot.slane %v553, %v557
      %v560 = vmul.f32 %v537, %v558
      %v561 = vmul.f32 %v538, %v558
      %v562 = vmul.f32 %v539, %v558
      %v563 = vmul.f32 %v540, %v558
      %v564 = vmul.f32 %v541, %v558
      %v565 = vmul.f32 %v542, %v558
      %v566 = vmul.f32 %v543, %v558
      %v567 = vmul.f32 %v544, %v558
      %v568 = vmul.f32 %v545, %v558
      %v569 = vmul.f32 %v546, %v558
      %v570 = vmul.f32 %v547, %v558
      %v571 = vmul.f32 %v548, %v558
      %v572 = vmul.f32 %v549, %v558
      %v573 = vmul.f32 %v550, %v558
      %v574 = vmul.f32 %v551, %v558
      %v575 = vmul.f32 %v552, %v558
      %v576 = vld [vmem:[%s4] sm:$0x1]
      %v578 = vlaneseq
      %v579 = vshrl.u32 %v578, 7
      %v580 = vsub.s32 0, %v579
      %v581 = vrot.slane %v576, %v580
      %v583 = vadd.f32 %v560, %v581
      %v584 = vadd.f32 %v561, %v581
      %v585 = vadd.f32 %v562, %v581
      %v586 = vadd.f32 %v563, %v581
      %v587 = vadd.f32 %v564, %v581
      %v588 = vadd.f32 %v565, %v581
      %v589 = vadd.f32 %v566, %v581
      %v590 = vadd.f32 %v567, %v581
      %v591 = vadd.f32 %v568, %v581
      %v592 = vadd.f32 %v569, %v581
      %v593 = vadd.f32 %v570, %v581
      %v594 = vadd.f32 %v571, %v581
      %v595 = vadd.f32 %v572, %v581
      %v596 = vadd.f32 %v573, %v581
      %v597 = vadd.f32 %v574, %v581
      %v598 = vadd.f32 %v575, %v581
      %599 = vst.msk [vmem:[#allocation2] sm:$0xff] %vm295, %v583
      %600 = vst.msk [vmem:[#allocation2 + $0x8] sm:$0xff] %vm295, %v584
      %601 = vst.msk [vmem:[#allocation2 + $0x10] sm:$0xff] %vm295, %v585
      %602 = vst.msk [vmem:[#allocation2 + $0x18] sm:$0xff] %vm295, %v586
      %603 = vst.msk [vmem:[#allocation2 + $0x20] sm:$0xff] %vm295, %v587
      %604 = vst.msk [vmem:[#allocation2 + $0x28] sm:$0xff] %vm295, %v588
      %605 = vst.msk [vmem:[#allocation2 + $0x30] sm:$0xff] %vm295, %v589
      %606 = vst.msk [vmem:[#allocation2 + $0x38] sm:$0xff] %vm295, %v590
      %607 = vst.msk [vmem:[#allocation2 + $0x40] sm:$0xff] %vm295, %v591
      %608 = vst.msk [vmem:[#allocation2 + $0x48] sm:$0xff] %vm295, %v592
      %609 = vst.msk [vmem:[#allocation2 + $0x50] sm:$0xff] %vm295, %v593
      %610 = vst.msk [vmem:[#allocation2 + $0x58] sm:$0xff] %vm295, %v594
      %611 = vst.msk [vmem:[#allocation2 + $0x60] sm:$0xff] %vm295, %v595
      %612 = vst.msk [vmem:[#allocation2 + $0x68] sm:$0xff] %vm295, %v596
      %613 = vst.msk [vmem:[#allocation2 + $0x70] sm:$0xff] %vm295, %v597
      %614 = vst.msk [vmem:[#allocation2 + $0x78] sm:$0xff] %vm295, %v598
    $region33: #{_cls_head_call.1} parent=1 // pred_fallthru
      _
    %v615 = vld [vmem:[#allocation2] sm:$0xff]
    %v616 = vld [vmem:[#allocation2 + $0x8] sm:$0xff]
    %v617 = vld [vmem:[#allocation2 + $0x10] sm:$0xff]
    %v618 = vld [vmem:[#allocation2 + $0x18] sm:$0xff]
    %v619 = vld [vmem:[#allocation2 + $0x20] sm:$0xff]
    %v620 = vld [vmem:[#allocation2 + $0x28] sm:$0xff]
    %v621 = vld [vmem:[#allocation2 + $0x30] sm:$0xff]
    %v622 = vld [vmem:[#allocation2 + $0x38] sm:$0xff]
    %v623 = vld [vmem:[#allocation2 + $0x40] sm:$0xff]
    %v624 = vld [vmem:[#allocation2 + $0x48] sm:$0xff]
    %v625 = vld [vmem:[#allocation2 + $0x50] sm:$0xff]
    %v626 = vld [vmem:[#allocation2 + $0x58] sm:$0xff]
    %v627 = vld [vmem:[#allocation2 + $0x60] sm:$0xff]
    %v628 = vld [vmem:[#allocation2 + $0x68] sm:$0xff]
    %v629 = vld [vmem:[#allocation2 + $0x70] sm:$0xff]
    %v630 = vld [vmem:[#allocation2 + $0x78] sm:$0xff]
    %v631 = vld [vmem:[%s5] sm:$0xff]
    %v632 = vld [vmem:[%s5 + $0x8] sm:$0xff]
    %v633 = vld [vmem:[%s5 + $0x10] sm:$0xff]
    %v634 = vld [vmem:[%s5 + $0x18] sm:$0xff]
    %v635 = vld [vmem:[%s6] sm:$0x1]
    %v637 = vlaneseq
    %v638 = vshrl.u32 %v637, 7
    %v639 = vsub.s32 0, %v638
    %v640 = vrot.slane %v635, %v639
    %vm642 = vcmask 261120
    %v644 = vsel %vm642, %v615, 0
    %v647 = vsel %vm642, %v616, 0
    %v650 = vsel %vm642, %v617, 0
    %v653 = vsel %vm642, %v618, 0
    %v656 = vsel %vm642, %v619, 0
    %v659 = vsel %vm642, %v620, 0
    %v662 = vsel %vm642, %v621, 0
    %v665 = vsel %vm642, %v622, 0
    %v668 = vsel %vm642, %v623, 0
    %v671 = vsel %vm642, %v624, 0
    %v674 = vsel %vm642, %v625, 0
    %v677 = vsel %vm642, %v626, 0
    %v680 = vsel %vm642, %v627, 0
    %v683 = vsel %vm642, %v628, 0
    %v686 = vsel %vm642, %v629, 0
    %v689 = vsel %vm642, %v630, 0
    %691 = vmatprep.subr.mxu0 0.0
    %692 = vmatpush1.msra.mxu0 0.0
    %693 = vmatprep.subr.mxu0 0.0
    %694 = vmatpush1.msra.mxu0 0.0
    %695 = vmatprep.subr.mxu0 0.0
    %696 = vmatpush1.msra.mxu0 0.0
    %697 = vmatprep.subr.mxu0 0.0
    %698 = vmatpush1.msra.mxu0 0.0
    %699 = vmatprep.subr.mxu0 0.0
    %700 = vmatpush1.msra.mxu0 0.0
    %701 = vmatprep.subr.mxu0 0.0
    %702 = vmatpush1.msra.mxu0 0.0
    %703 = vmatprep.subr.mxu0 0.0
    %704 = vmatpush1.msra.mxu0 0.0
    %705 = vmatprep.subr.mxu0 0.0
    %706 = vmatpush1.msra.mxu0 0.0
    %707 = vmatprep.subr.mxu0 0.0
    %708 = vmatpush1.msra.mxu0 0.0
    %709 = vmatprep.subr.mxu0 0.0
    %710 = vmatpush1.msra.mxu0 0.0
    %711 = vmatprep.subr.mxu0 0.0
    %712 = vmatpush1.msra.mxu0 0.0
    %713 = vmatprep.subr.mxu0 0.0
    %714 = vmatpush1.msra.mxu0 0.0
    %715 = vmatprep.subr.mxu0 0.0
    %716 = vmatpush1.msra.mxu0 %v634
    %717 = vmatprep.subr.mxu0 0.0
    %718 = vmatpush1.msra.mxu0 %v633
    %719 = vmatprep.subr.mxu0 0.0
    %720 = vmatpush1.msra.mxu0 %v632
    %721 = vmatprep.subr.mxu0 0.0
    %722 = vmatpush1.msra.mxu0 %v631
    %723 = vmatprep.subr.mxu0 0.0
    %724 = vmatpush2.msra.mxu0 0.0
    %725 = vmatprep.subr.mxu0 0.0
    %726 = vmatpush2.msra.mxu0 0.0
    %727 = vmatprep.subr.mxu0 0.0
    %728 = vmatpush2.msra.mxu0 0.0
    %729 = vmatprep.subr.mxu0 0.0
    %730 = vmatpush2.msra.mxu0 0.0
    %731 = vmatprep.subr.mxu0 0.0
    %732 = vmatpush2.msra.mxu0 0.0
    %733 = vmatprep.subr.mxu0 0.0
    %734 = vmatpush2.msra.mxu0 0.0
    %735 = vmatprep.subr.mxu0 0.0
    %736 = vmatpush2.msra.mxu0 0.0
    %737 = vmatprep.subr.mxu0 0.0
    %738 = vmatpush2.msra.mxu0 0.0
    %739 = vmatprep.subr.mxu0 0.0
    %740 = vmatpush2.msra.mxu0 0.0
    %741 = vmatprep.subr.mxu0 0.0
    %742 = vmatpush2.msra.mxu0 0.0
    %743 = vmatprep.subr.mxu0 0.0
    %744 = vmatpush2.msra.mxu0 0.0
    %745 = vmatprep.subr.mxu0 0.0
    %746 = vmatpush2.msra.mxu0 0.0
    %747 = vmatprep.subr.mxu0 0.0
    %748 = vmatpush2.msra.mxu0 0.0
    %749 = vmatprep.subr.mxu0 0.0
    %750 = vmatpush2.msra.mxu0 0.0
    %751 = vmatprep.subr.mxu0 0.0
    %752 = vmatpush2.msra.mxu0 0.0
    %753 = vmatprep.subr.mxu0 0.0
    %754 = vmatpush2.msra.mxu0 0.0
    %755 = vmatprep.mubr.f32.mxu0 0.0
    %756 = vmatmul.mubr.f32.gmra.mxu0 %v644
    %v757 = vpop.f32.mrf.mxu0
    %v758 = vadd.f32 %v640, %v757
    %v759 = vpop.f32.mrf.mxu0
    %760 = vmatprep.mubr.f32.mxu0 0.0
    %761 = vmatmul.mubr.f32.gmra.mxu0 %v647
    %v762 = vpop.f32.mrf.mxu0
    %v763 = vadd.f32 %v640, %v762
    %v764 = vpop.f32.mrf.mxu0
    %765 = vmatprep.mubr.f32.mxu0 0.0
    %766 = vmatmul.mubr.f32.gmra.mxu0 %v650
    %v767 = vpop.f32.mrf.mxu0
    %v768 = vadd.f32 %v640, %v767
    %v769 = vpop.f32.mrf.mxu0
    %770 = vmatprep.mubr.f32.mxu0 0.0
    %771 = vmatmul.mubr.f32.gmra.mxu0 %v653
    %v772 = vpop.f32.mrf.mxu0
    %v773 = vadd.f32 %v640, %v772
    %v774 = vpop.f32.mrf.mxu0
    %775 = vmatprep.mubr.f32.mxu0 0.0
    %776 = vmatmul.mubr.f32.gmra.mxu0 %v656
    %v777 = vpop.f32.mrf.mxu0
    %v778 = vadd.f32 %v640, %v777
    %v779 = vpop.f32.mrf.mxu0
    %780 = vmatprep.mubr.f32.mxu0 0.0
    %781 = vmatmul.mubr.f32.gmra.mxu0 %v659
    %v782 = vpop.f32.mrf.mxu0
    %v783 = vadd.f32 %v640, %v782
    %v784 = vpop.f32.mrf.mxu0
    %785 = vmatprep.mubr.f32.mxu0 0.0
    %786 = vmatmul.mubr.f32.gmra.mxu0 %v662
    %v787 = vpop.f32.mrf.mxu0
    %v788 = vadd.f32 %v640, %v787
    %v789 = vpop.f32.mrf.mxu0
    %790 = vmatprep.mubr.f32.mxu0 0.0
    %791 = vmatmul.mubr.f32.gmra.mxu0 %v665
    %v792 = vpop.f32.mrf.mxu0
    %v793 = vadd.f32 %v640, %v792
    %v794 = vpop.f32.mrf.mxu0
    %795 = vmatprep.mubr.f32.mxu0 0.0
    %796 = vmatmul.mubr.f32.gmra.mxu0 %v668
    %v797 = vpop.f32.mrf.mxu0
    %v798 = vadd.f32 %v640, %v797
    %v799 = vpop.f32.mrf.mxu0
    %800 = vmatprep.mubr.f32.mxu0 0.0
    %801 = vmatmul.mubr.f32.gmra.mxu0 %v671
    %v802 = vpop.f32.mrf.mxu0
    %v803 = vadd.f32 %v640, %v802
    %v804 = vpop.f32.mrf.mxu0
    %805 = vmatprep.mubr.f32.mxu0 0.0
    %806 = vmatmul.mubr.f32.gmra.mxu0 %v674
    %v807 = vpop.f32.mrf.mxu0
    %v808 = vadd.f32 %v640, %v807
    %v809 = vpop.f32.mrf.mxu0
    %810 = vmatprep.mubr.f32.mxu0 0.0
    %811 = vmatmul.mubr.f32.gmra.mxu0 %v677
    %v812 = vpop.f32.mrf.mxu0
    %v813 = vadd.f32 %v640, %v812
    %v814 = vpop.f32.mrf.mxu0
    %815 = vmatprep.mubr.f32.mxu0 0.0
    %816 = vmatmul.mubr.f32.gmra.mxu0 %v680
    %v817 = vpop.f32.mrf.mxu0
    %v818 = vadd.f32 %v640, %v817
    %v819 = vpop.f32.mrf.mxu0
    %820 = vmatprep.mubr.f32.mxu0 0.0
    %821 = vmatmul.mubr.f32.gmra.mxu0 %v683
    %v822 = vpop.f32.mrf.mxu0
    %v823 = vadd.f32 %v640, %v822
    %v824 = vpop.f32.mrf.mxu0
    %825 = vmatprep.mubr.f32.mxu0 0.0
    %826 = vmatmul.mubr.f32.gmra.mxu0 %v686
    %v827 = vpop.f32.mrf.mxu0
    %v828 = vadd.f32 %v640, %v827
    %v829 = vpop.f32.mrf.mxu0
    %830 = vmatprep.mubr.f32.mxu0 0.0
    %831 = vmatmul.mubr.f32.gmra.mxu0 %v689
    %v832 = vpop.f32.mrf.mxu0
    %v833 = vadd.f32 %v640, %v832
    %v834 = vpop.f32.mrf.mxu0
    %835 = vdwg.mxu0
    %836 = vst [vmem:[#allocation3] sm:$0xff] %v758
    %837 = vst [vmem:[#allocation3 + $0x8] sm:$0xff] %v763
    %838 = vst [vmem:[#allocation3 + $0x10] sm:$0xff] %v768
    %839 = vst [vmem:[#allocation3 + $0x18] sm:$0xff] %v773
    %840 = vst [vmem:[#allocation3 + $0x20] sm:$0xff] %v778
    %841 = vst [vmem:[#allocation3 + $0x28] sm:$0xff] %v783
    %842 = vst [vmem:[#allocation3 + $0x30] sm:$0xff] %v788
    %843 = vst [vmem:[#allocation3 + $0x38] sm:$0xff] %v793
    %844 = vst [vmem:[#allocation3 + $0x40] sm:$0xff] %v798
    %845 = vst [vmem:[#allocation3 + $0x48] sm:$0xff] %v803
    %846 = vst [vmem:[#allocation3 + $0x50] sm:$0xff] %v808
    %847 = vst [vmem:[#allocation3 + $0x58] sm:$0xff] %v813
    %848 = vst [vmem:[#allocation3 + $0x60] sm:$0xff] %v818
    %849 = vst [vmem:[#allocation3 + $0x68] sm:$0xff] %v823
    %850 = vst [vmem:[#allocation3 + $0x70] sm:$0xff] %v828
    %851 = vst [vmem:[#allocation3 + $0x78] sm:$0xff] %v833
    // Predicated region
    $region34: #{_cls_head_call.1} parent=1 // pred_check
      _
    $region35: #{_cls_head_call.1} parent=1 // pred_check_branch
      %853 = sbr.rel (0) target = $region37
    $region36: #{_cls_head_call.1} parent=1 // pred_region
      %s855 = ssub.s32 2048, 2048
      %856 = vsyncadd [#allocation4], %s855
      %s857 = sshll.u32 [#allocation3], 4
      %s858 = int_to_ptr.vmem [resolvable:$true] %s857
      %863 = dma.vmem_to_hbm [thread:$0]  %s858, 2048, %s7, [#allocation4], 128, 128, 8
    $region37: #{_cls_head_call.1} parent=1 // pred_fallthru
      _
    // Predicated region
    $region38: #{_cls_head_call.1} parent=1 // pred_check
      _
    $region39: #{_cls_head_call.1} parent=1 // pred_check_branch
      %865 = sbr.rel (0) target = $region41
    $region40: #{_cls_head_call.1} parent=1 // pred_region
      %866 = dma.done [#allocation4], 2048
    $region41: #{_cls_head_call.1} parent=1 // pred_fallthru
      _
    %867 = vsyncpa [#allocation4], 1

</llo_original>
